<compile_context>
chip_gen: v5e
topology: v5e:2x2
jax: 0.10.0
libtpu: 0.0.40
codegen_flags: <defaults>
</compile_context>

<pallas_src>
import functools
import math

import jax
import jax.numpy as jnp
from jax.experimental import pallas as pl
from jax.experimental.pallas import tpu as pltpu

_LANE = 128
_HEADROOM = 2 * 1024 * 1024  # scoped-VMEM slack left for the compiler


def _vmem_capacity_bytes():
    """Physical VMEM per TensorCore; conservative 128 MiB default if unknown."""
    try:
        info = pltpu.get_tpu_info()
        cap = getattr(info, "vmem_capacity_bytes", None)
        if cap:
            return int(cap)
    except Exception:
        pass
    return 128 * 1024 * 1024


def _concat_lane_kernel(offsets, widths, *refs):
    """2-D blocks: out[:, off:off+w] = in (concat axis folded onto lanes)."""
    out_ref = refs[-1]
    in_refs = refs[:-1]
    # TODO(synk): on v5e, same-dtype inputs could use an in-kernel VMEM->VMEM
    # pltpu.sync_copy to free the single vst slot; kept as vreg stores here.
    for in_ref, off, w in zip(in_refs, offsets, widths):
        out_ref[:, off:off + w] = in_ref[...].astype(out_ref.dtype)


def _concat_sublane_kernel(offsets, sizes, *refs):
    """3-D blocks: out[:, off:off+s, :] = in (concat on sublanes, suffix on lanes)."""
    out_ref = refs[-1]
    in_refs = refs[:-1]
    for in_ref, off, s in zip(in_refs, offsets, sizes):
        out_ref[:, off:off + s, :] = in_ref[...].astype(out_ref.dtype)


def _pick_tile(n_units, unit_bytes, quantum, budget, limit, want_split):
    """Largest tile (in units) along one axis whose double-buffered working set
    fits `budget`, quantised to `quantum`.  If `want_split` (v7x), make sure the
    grid has >=2 steps so "parallel" can shard across both TensorCores.
    Returns None if nothing fits under the scoped-VMEM `limit`."""
    max_units = budget // (2 * unit_bytes)
    if max_units >= n_units:
        tile = n_units
        if want_split and n_units >= 2 * quantum:
            half = -(-n_units // 2)                       # ceil(n/2)
            tile = min(-(-half // quantum) * quantum, n_units)
    elif max_units >= quantum:
        tile = (max_units // quantum) * quantum
    else:
        tile = min(quantum, n_units)
    if 2 * tile * unit_bytes > limit - _HEADROOM:
        return None
    return int(tile)


def table_module_forward(xs, dim, *, min_pallas_bytes=512 * 1024):
    """JAX/Pallas equivalent of TableModule().forward(xs, dim) == torch.cat(xs, dim)."""
    xs = [jnp.asarray(x) for x in xs]
    assert len(xs) >= 1
    ndim = xs[0].ndim
    assert ndim >= 1
    if dim < 0:
        dim += ndim
    assert 0 <= dim < ndim

    ref_shape = list(xs[0].shape)
    for x in xs[1:]:
        assert x.ndim == ndim
        for a in range(ndim):
            if a != dim:
                assert x.shape[a] == ref_shape[a], "shapes must match except on concat dim"

    # NOTE: jnp.result_type may differ from torch.cat promotion for exotic
    # mixed int/float combinations; identical when all inputs share a dtype.
    out_dtype = jnp.result_type(*[x.dtype for x in xs])

    xs = [x for x in xs if x.shape[dim] > 0]
    sizes = [int(x.shape[dim]) for x in xs]
    total = sum(sizes)
    out_shape_nd = list(ref_shape)
    out_shape_nd[dim] = total
    out_shape_nd = tuple(out_shape_nd)

    prefix = math.prod(out_shape_nd[:dim])
    suffix = math.prod(out_shape_nd[dim + 1:])

    if not xs or prefix == 0 or suffix == 0 or total == 0:
        return jnp.zeros(out_shape_nd, out_dtype)

    out_item = int(jnp.dtype(out_dtype).itemsize)
    in_items = [int(x.dtype.itemsize) for x in xs]
    in_bytes = sum(x.size * it for x, it in zip(xs, in_items))
    out_bytes = prefix * total * suffix * out_item
    total_bytes = in_bytes + out_bytes

    # Tiny problems: fixed pallas_call launch / DMA-descriptor overhead
    # dominates; XLA's fused concat wins. Pass min_pallas_bytes=0 to force
    # the Pallas path (used by the demo below).
    if total_bytes < min_pallas_bytes:
        return jnp.concatenate(xs, axis=dim).astype(out_dtype)

    # ---- generation-aware VMEM sizing --------------------------------------
    vmem_cap = _vmem_capacity_bytes()
    is_small_vmem = vmem_cap < 96 * 1024 * 1024      # v7x-class: 64 MiB/TC, 2 TCs
    if is_small_vmem:
        vmem_budget = 32 * 1024 * 1024               # double-buffered working set
        vmem_limit = 48 * 1024 * 1024                # scoped request, ~16 MiB headroom
    else:                                            # v5e/v6e: 128 MiB, single TC
        vmem_budget = 56 * 1024 * 1024
        vmem_limit = 80 * 1024 * 1024
    want_split = is_small_vmem                       # >=2 grid steps only pays on v7x

    # dtype-aware sublane pack: 8 rows for 32-bit, 16 for 16-bit, 32 for 8-bit.
    min_item = min(in_items + [out_item])
    pack = max(8, 32 // max(min_item, 1))

    widths = [s * suffix for s in sizes]
    out_w = total * suffix
    lane_offs, size_offs = [], []
    acc = 0
    for s in sizes:
        size_offs.append(acc)
        lane_offs.append(acc * suffix)
        acc += s

    lane_aligned = all(o % _LANE == 0 for o in lane_offs) and all(
        w % _LANE == 0 for w in widths)

    # bytes per prefix-row (row tiling) and per suffix-column (lane tiling),
    # counting inputs + output (both get double-buffered by the pipeline).
    row_bytes = sum(w * it for w, it in zip(widths, in_items)) + out_w * out_item
    col_bytes = prefix * (sum(s * it for s, it in zip(sizes, in_items)) + total * out_item)

    compiler_params = pltpu.CompilerParams(
        dimension_semantics=("parallel",),
        vmem_limit_bytes=vmem_limit,
    )
    cost = pl.CostEstimate(flops=0, transcendentals=0, bytes_accessed=int(total_bytes))

    # ---- layout selection ----------------------------------------------------
    if prefix == 1 and suffix >= 2 * _LANE:
        layout = "C"                       # dim == 0 style: tile the lane axis
    elif lane_aligned or suffix < _LANE:
        layout = "A"                       # lane-dense 2-D slabs, row tiled
    else:
        layout = "B"                       # sublane-offset 3-D blocks, row tiled

    if layout == "A":
        tile_rows = _pick_tile(prefix, row_bytes, pack, vmem_budget, vmem_limit, want_split)
        if tile_rows is not None:
            xs2d = [x.reshape(prefix, w) for x, w in zip(xs, widths)]
            kernel = functools.partial(_concat_lane_kernel, tuple(lane_offs), tuple(widths))
            in_specs = [pl.BlockSpec((tile_rows, w), lambda i: (i, 0)) for w in widths]
            out_spec = pl.BlockSpec((tile_rows, out_w), lambda i: (i, 0))
            out2d = pl.pallas_call(
                kernel,
                out_shape=jax.ShapeDtypeStruct((prefix, out_w), out_dtype),
                grid=(pl.cdiv(prefix, tile_rows),),
                in_specs=in_specs,
                out_specs=out_spec,
                compiler_params=compiler_params,
                cost_estimate=cost,
            )(*xs2d)
            return out2d.reshape(out_shape_nd)
        # Rows too wide to stage: try lane tiling if the lane axis is wide enough.
        layout = "C" if suffix >= _LANE else None

    if layout == "B":
        tile_rows = _pick_tile(prefix, row_bytes, 1, vmem_budget, vmem_limit, want_split)
        if tile_rows is not None:
            xs3d = [x.reshape(prefix, s, suffix) for x, s in zip(xs, sizes)]
            kernel = functools.partial(_concat_sublane_kernel, tuple(size_offs), tuple(sizes))
            in_specs = [pl.BlockSpec((tile_rows, s, suffix), lambda i: (i, 0, 0)) for s in sizes]
            out_spec = pl.BlockSpec((tile_rows, total, suffix), lambda i: (i, 0, 0))
            out3d = pl.pallas_call(
                kernel,
                out_shape=jax.ShapeDtypeStruct((prefix, total, suffix), out_dtype),
                grid=(pl.cdiv(prefix, tile_rows),),
                in_specs=in_specs,
                out_specs=out_spec,
                compiler_params=compiler_params,
                cost_estimate=cost,
            )(*xs3d)
            return out3d.reshape(out_shape_nd)
        layout = "C"

    if layout == "C":
        tile_s = _pick_tile(suffix, col_bytes, _LANE, vmem_budget, vmem_limit, want_split)
        if tile_s is not None:
            xs3d = [x.reshape(prefix, s, suffix) for x, s in zip(xs, sizes)]
            kernel = functools.partial(_concat_sublane_kernel, tuple(size_offs), tuple(sizes))
            in_specs = [pl.BlockSpec((prefix, s, tile_s), lambda j: (0, 0, j)) for s in sizes]
            out_spec = pl.BlockSpec((prefix, total, tile_s), lambda j: (0, 0, j))
            out3d = pl.pallas_call(
                kernel,
                out_shape=jax.ShapeDtypeStruct((prefix, total, suffix), out_dtype),
                grid=(pl.cdiv(suffix, tile_s),),
                in_specs=in_specs,
                out_specs=out_spec,
                compiler_params=compiler_params,
                cost_estimate=cost,
            )(*xs3d)
            return out3d.reshape(out_shape_nd)

    # TODO(synk): pathologically shaped concats (e.g. giant 1-D inputs where no
    # VMEM-resident tiling fits) — stream with direct HBM->HBM make_async_copy.
    return jnp.concatenate(xs, axis=dim).astype(out_dtype)


if __name__ == "__main__":
    key = jax.random.PRNGKey(0)
    k1, k2, k3, k4, k5, k6, k7 = jax.random.split(key, 7)

    # 1) Lane-aligned layout A: NCHW concat on channels (suffix = 16*16 = 256).
    a1 = jax.random.normal(k1, (2, 4, 16, 16), dtype=jnp.float32)
    a2 = jax.random.normal(k2, (2, 4, 16, 16), dtype=jnp.float32)
    a3 = jax.random.normal(k3, (2, 4, 16, 16), dtype=jnp.float32)
    out_a = jax.block_until_ready(table_module_forward([a1, a2, a3], 1, min_pallas_bytes=0))
    ref_a = jnp.concatenate([a1, a2, a3], axis=1)
    assert out_a.shape == ref_a.shape and out_a.dtype == ref_a.dtype
    assert jnp.allclose(out_a, ref_a), "layout A mismatch"

    # 2) Sublane-offset layout B (suffix = 12*12 = 144, not lane-aligned) + fused cast.
    b1 = jax.random.normal(k4, (2, 3, 12, 12), dtype=jnp.bfloat16)
    b2 = jax.random.normal(k5, (2, 5, 12, 12), dtype=jnp.float32)
    out_b = jax.block_until_ready(table_module_forward([b1, b2], 1, min_pallas_bytes=0))
    ref_b = jnp.concatenate([b1.astype(jnp.float32), b2], axis=1)
    assert out_b.shape == ref_b.shape and out_b.dtype == ref_b.dtype
    assert jnp.allclose(out_b, ref_b), "layout B mismatch"

    # 3) prefix == 1 (dim=0 concat) layout C: lane-tiled sublane concat.
    c1 = jax.random.normal(k6, (4, 8, 32), dtype=jnp.float32)
    c2 = jax.random.normal(k7, (2, 8, 32), dtype=jnp.float32)
    out_c = jax.block_until_ready(table_module_forward([c1, c2], 0, min_pallas_bytes=0))
    ref_c = jnp.concatenate([c1, c2], axis=0)
    assert out_c.shape == ref_c.shape and out_c.dtype == ref_c.dtype
    assert jnp.allclose(out_c, ref_c), "layout C mismatch"

    print("KERNEL_OK")
</pallas_src>

<mosaic_0001>
module attributes {stable_mosaic.version = 11 : i64} {
  func.func @_concat_lane_kernel(%arg0: i32, %arg1: memref<2x1024xf32, #tpu.memory_space<vmem>>, %arg2: memref<2x1024xf32, #tpu.memory_space<vmem>>, %arg3: memref<2x1024xf32, #tpu.memory_space<vmem>>, %arg4: memref<2x3072xf32, #tpu.memory_space<vmem>>) attributes {dimension_semantics = [#tpu.dimension_semantics<parallel>], iteration_bounds = array<i64: 1>, scalar_prefetch = 0 : i64, scratch_operands = 0 : i64, tpu.core_type = #tpu.core_type<tc>, window_params = [{transform_indices = @transform_0, window_bounds = array<i64: 2, 1024>}, {transform_indices = @transform_1, window_bounds = array<i64: 2, 1024>}, {transform_indices = @transform_2, window_bounds = array<i64: 2, 1024>}, {transform_indices = @transform_3, window_bounds = array<i64: 2, 3072>}]} {
    %c0 = arith.constant 0 : index
    %c0_0 = arith.constant 0 : index
    %0 = vector.load %arg1[%c0, %c0_0] : memref<2x1024xf32, #tpu.memory_space<vmem>>, vector<2x1024xf32>
    %c0_1 = arith.constant 0 : index
    %c0_2 = arith.constant 0 : index
    %1 = vector.load %arg4[%c0_1, %c0_2] : memref<2x3072xf32, #tpu.memory_space<vmem>>, vector<2x1024xf32>
    tpu.vector_store %arg4[%c0_1, %c0_2], %0 {strides = array<i32>} : memref<2x3072xf32, #tpu.memory_space<vmem>>, vector<2x1024xf32>,
    %c0_3 = arith.constant 0 : index
    %c0_4 = arith.constant 0 : index
    %2 = vector.load %arg2[%c0_3, %c0_4] : memref<2x1024xf32, #tpu.memory_space<vmem>>, vector<2x1024xf32>
    %c0_5 = arith.constant 0 : index
    %c1024 = arith.constant 1024 : index
    %3 = vector.load %arg4[%c0_5, %c1024] : memref<2x3072xf32, #tpu.memory_space<vmem>>, vector<2x1024xf32>
    tpu.vector_store %arg4[%c0_5, %c1024], %2 {strides = array<i32>} : memref<2x3072xf32, #tpu.memory_space<vmem>>, vector<2x1024xf32>,
    %c0_6 = arith.constant 0 : index
    %c0_7 = arith.constant 0 : index
    %4 = vector.load %arg3[%c0_6, %c0_7] : memref<2x1024xf32, #tpu.memory_space<vmem>>, vector<2x1024xf32>
    %c0_8 = arith.constant 0 : index
    %c2048 = arith.constant 2048 : index
    %5 = vector.load %arg4[%c0_8, %c2048] : memref<2x3072xf32, #tpu.memory_space<vmem>>, vector<2x1024xf32>
    tpu.vector_store %arg4[%c0_8, %c2048], %4 {strides = array<i32>} : memref<2x3072xf32, #tpu.memory_space<vmem>>, vector<2x1024xf32>,
    return
  }
  func.func @transform_0(%arg0: i32) -> (i32, i32) {
    %c0_i32 = arith.constant 0 : i32
    %c0_i32_0 = arith.constant 0 : i32
    return %arg0, %c0_i32 : i32, i32
  }
  func.func @transform_1(%arg0: i32) -> (i32, i32) {
    %c0_i32 = arith.constant 0 : i32
    %c0_i32_0 = arith.constant 0 : i32
    return %arg0, %c0_i32 : i32, i32
  }
  func.func @transform_2(%arg0: i32) -> (i32, i32) {
    %c0_i32 = arith.constant 0 : i32
    %c0_i32_0 = arith.constant 0 : i32
    return %arg0, %c0_i32 : i32, i32
  }
  func.func @transform_3(%arg0: i32) -> (i32, i32) {
    %c0_i32 = arith.constant 0 : i32
    %c0_i32_0 = arith.constant 0 : i32
    return %arg0, %c0_i32 : i32, i32
  }
}

</mosaic_0001>

<llo_original>
// kernel: tpu_custom_call.1
$region0: #{tpu_custom_call.1}
  #allocation0 [shape = 'u32[]', space=smem, size = 0x4, offset = 0x4, fixed_abs, tag = 'smem constant byte address 0x4 - core index']
  #allocation1 [shape = 'u32[72,128]{1,0:T(1,128)}', space=vmem, size = 0x9000, scoped, tag = 'internal scratch']
  %s0 = inlined_call_operand.hbm [shape: f32[2,1024], index: 0, kind: input, shape index: {}]
  %s1 = inlined_call_operand.hbm [shape: f32[2,1024], index: 1, kind: input, shape index: {}]
  %s2 = inlined_call_operand.hbm [shape: f32[2,1024], index: 2, kind: input, shape index: {}]
  %s3 = inlined_call_operand.hbm [shape: f32[2,3072], index: 3, kind: output, shape index: {}]
  %s4 = sld [smem:[#allocation0]]
  $region34: #{tpu_custom_call.1} parent=0
    _
  %s6 = ssub.s32 1, %s4
  %s7 = scalar_select 0, %s6, %s4
  $region1: #{tpu_custom_call.1} parent=0
    #allocation2 [shape = 'u8[8192]{0}', space=vmem, size = 0x2000, scoped, tag = 'input window, operand 0, single buffered']
    #allocation3 [shape = 's32[1]{0}', space=sflag, size = 0x4, scoped, tag = 'scoped memory for tpu_custom_call.1']
    #allocation4 [shape = 's32[1]{0}', space=sflag, size = 0x4, scoped, tag = 'scoped memory for tpu_custom_call.1']
    #allocation5 [shape = 'u8[8192]{0}', space=vmem, size = 0x2000, scoped, tag = 'input window, operand 1, single buffered']
    #allocation6 [shape = 's32[1]{0}', space=sflag, size = 0x4, scoped, tag = 'scoped memory for tpu_custom_call.1']
    #allocation7 [shape = 'u8[8192]{0}', space=vmem, size = 0x2000, scoped, tag = 'input window, operand 2, single buffered']
    #allocation8 [shape = 'u8[24576]{0}', space=vmem, size = 0x6000, scoped, tag = 'output window, operand 0, single buffered']
    %8 = vsyncpa [#allocation3], 0
    %9 = vsyncpa [#allocation6], 0
    %10 = vsyncpa [#allocation4], 0
    // Predicated region
    $region2: #{tpu_custom_call.1} parent=1 // pred_check
      _
    $region3: #{tpu_custom_call.1} parent=1 // pred_check_branch
      %12 = sbr.rel (0) target = $region5
    $region4: #{tpu_custom_call.1} parent=1 // pred_region
      %14 = vsyncadd [#allocation3], 0
      %s16 = sshll.u32 %s0, 4
      %s17 = int_to_ptr.hbm [resolvable:$true] %s16
      %s18 = sshll.u32 [#allocation2], 4
      %s19 = int_to_ptr.vmem [resolvable:$true] %s18
      %21 = dma.hbm_to_vmem [thread:$0]  %s17, 256, %s19, [#allocation3]
    $region5: #{tpu_custom_call.1} parent=1 // pred_fallthru
      _
    // Predicated region
    $region6: #{tpu_custom_call.1} parent=1 // pred_check
      _
    $region7: #{tpu_custom_call.1} parent=1 // pred_check_branch
      %23 = sbr.rel (0) target = $region9
    $region8: #{tpu_custom_call.1} parent=1 // pred_region
      %25 = vsyncadd [#allocation6], 0
      %s27 = sshll.u32 %s1, 4
      %s28 = int_to_ptr.hbm [resolvable:$true] %s27
      %s29 = sshll.u32 [#allocation5], 4
      %s30 = int_to_ptr.vmem [resolvable:$true] %s29
      %32 = dma.hbm_to_vmem [thread:$0]  %s28, 256, %s30, [#allocation6]
    $region9: #{tpu_custom_call.1} parent=1 // pred_fallthru
      _
    // Predicated region
    $region10: #{tpu_custom_call.1} parent=1 // pred_check
      _
    $region11: #{tpu_custom_call.1} parent=1 // pred_check_branch
      %34 = sbr.rel (0) target = $region13
    $region12: #{tpu_custom_call.1} parent=1 // pred_region
      %36 = vsyncadd [#allocation6], 0
      %s38 = sshll.u32 %s2, 4
      %s39 = int_to_ptr.hbm [resolvable:$true] %s38
      %s40 = sshll.u32 [#allocation7], 4
      %s41 = int_to_ptr.vmem [resolvable:$true] %s40
      %43 = dma.hbm_to_vmem [thread:$0]  %s39, 256, %s41, [#allocation6]
    $region13: #{tpu_custom_call.1} parent=1 // pred_fallthru
      _
    // Predicated region
    $region14: #{tpu_custom_call.1} parent=1 // pred_check
      _
    $region15: #{tpu_custom_call.1} parent=1 // pred_check_branch
      %45 = sbr.rel (0) target = $region17
    $region16: #{tpu_custom_call.1} parent=1 // pred_region
      %47 = dma.done [#allocation3], 256
    $region17: #{tpu_custom_call.1} parent=1 // pred_fallthru
      _
    // Predicated region
    $region18: #{tpu_custom_call.1} parent=1 // pred_check
      _
    $region19: #{tpu_custom_call.1} parent=1 // pred_check_branch
      %49 = sbr.rel (0) target = $region21
    $region20: #{tpu_custom_call.1} parent=1 // pred_region
      %51 = dma.done [#allocation6], 256
    $region21: #{tpu_custom_call.1} parent=1 // pred_fallthru
      _
    // Predicated region
    $region22: #{tpu_custom_call.1} parent=1 // pred_check
      _
    $region23: #{tpu_custom_call.1} parent=1 // pred_check_branch
      %53 = sbr.rel (0) target = $region25
    $region24: #{tpu_custom_call.1} parent=1 // pred_region
      %55 = dma.done [#allocation6], 256
    $region25: #{tpu_custom_call.1} parent=1 // pred_fallthru
      _
    %v56 = vld [vmem:[#allocation2] sm:$0xff]
    %v57 = vld [vmem:[#allocation2 + $0x8] sm:$0xff]
    %58 = vst [vmem:[#allocation8] sm:$0xff] %v56
    %59 = vst [vmem:[#allocation8 + $0x8] sm:$0xff] %v57
    %v60 = vld [vmem:[#allocation5] sm:$0xff]
    %v61 = vld [vmem:[#allocation5 + $0x8] sm:$0xff]
    %62 = vst [vmem:[#allocation8 + $0x10] sm:$0xff] %v60
    %63 = vst [vmem:[#allocation8 + $0x18] sm:$0xff] %v61
    %v64 = vld [vmem:[#allocation7] sm:$0xff]
    %v65 = vld [vmem:[#allocation7 + $0x8] sm:$0xff]
    %66 = vst [vmem:[#allocation8 + $0x20] sm:$0xff] %v64
    %67 = vst [vmem:[#allocation8 + $0x28] sm:$0xff] %v65
    // Predicated region
    $region26: #{tpu_custom_call.1} parent=1 // pred_check
      _
    $region27: #{tpu_custom_call.1} parent=1 // pred_check_branch
      %69 = sbr.rel (0) target = $region29
    $region28: #{tpu_custom_call.1} parent=1 // pred_region
      %71 = vsyncadd [#allocation4], 0
      %s73 = sshll.u32 [#allocation8], 4
      %s74 = int_to_ptr.vmem [resolvable:$true] %s73
      %s75 = sshll.u32 %s3, 4
      %s76 = int_to_ptr.hbm [resolvable:$true] %s75
      %78 = dma.vmem_to_hbm [thread:$0]  %s74, 768, %s76, [#allocation4]
    $region29: #{tpu_custom_call.1} parent=1 // pred_fallthru
      _
    // Predicated region
    $region30: #{tpu_custom_call.1} parent=1 // pred_check
      _
    $region31: #{tpu_custom_call.1} parent=1 // pred_check_branch
      %80 = sbr.rel (0) target = $region33
    $region32: #{tpu_custom_call.1} parent=1 // pred_region
      %82 = dma.done [#allocation4], 768
    $region33: #{tpu_custom_call.1} parent=1 // pred_fallthru
      _
    %83 = vsyncpa [#allocation3], 1
    %84 = vsyncpa [#allocation6], 1
    %85 = vsyncpa [#allocation4], 1

</llo_original>
